<compile_context>
chip_gen: v5e
topology: v5e:2x2
jax: 0.10.0
libtpu: 0.0.40
codegen_flags: <defaults>
</compile_context>

<pallas_src>
import functools
import math

import jax
import jax.numpy as jnp
from jax.experimental import pallas as pl
from jax.experimental.pallas import tpu as pltpu

# Fits every generation (v7x physical VMEM = 64 MiB); actual per-kernel usage
# with the default tiles below is well under this.
_VMEM_LIMIT = 64 * 1024 * 1024


def _pick_tile(dim, target):
    """`target` if it divides `dim`, else the full dim (always a legal block)."""
    return target if dim % target == 0 else dim


# ----------------------------------------------------------------------------
# Fused tiled matmul (+ bias, + optional exact GELU epilogue)
# ----------------------------------------------------------------------------
def _make_matmul_kernel(act):
    def kernel(x_ref, w_ref, b_ref, o_ref, acc_ref):
        @pl.when(pl.program_id(2) == 0)
        def _():
            acc_ref[...] = jnp.zeros_like(acc_ref)

        acc_ref[...] += jnp.dot(x_ref[...].astype(jnp.bfloat16),
                                w_ref[...].astype(jnp.bfloat16),
                                preferred_element_type=jnp.float32)

        @pl.when(pl.program_id(2) == pl.num_programs(2) - 1)
        def _():
            y = acc_ref[...] + b_ref[...].astype(jnp.float32)
            if act == "gelu":  # exact (erf) GELU, as HF RoBERTa uses
                y = 0.5 * y * (1.0 + jax.lax.erf(y * 0.7071067811865476))
            o_ref[...] = y.astype(o_ref.dtype)
    return kernel


def pallas_linear(x, w, b, act=None, out_dtype=jnp.float32,
                  tm=256, tn=768, tk=768):
    M, K = x.shape
    N = w.shape[1]
    tm, tn, tk = _pick_tile(M, tm), _pick_tile(N, tn), _pick_tile(K, tk)
    return pl.pallas_call(
        _make_matmul_kernel(act),
        grid=(M // tm, N // tn, K // tk),
        in_specs=[pl.BlockSpec((tm, tk), lambda i, j, k: (i, k)),
                  pl.BlockSpec((tk, tn), lambda i, j, k: (k, j)),
                  pl.BlockSpec((1, tn), lambda i, j, k: (0, j))],
        out_specs=pl.BlockSpec((tm, tn), lambda i, j, k: (i, j)),
        out_shape=jax.ShapeDtypeStruct((M, N), out_dtype),
        scratch_shapes=[pltpu.VMEM((tm, tn), jnp.float32)],
        compiler_params=pltpu.CompilerParams(
            dimension_semantics=("parallel", "parallel", "arbitrary"),
            vmem_limit_bytes=_VMEM_LIMIT),
    )(x, w.astype(jnp.bfloat16), b.reshape(1, N))


# ----------------------------------------------------------------------------
# Fused tiled matmul + bias + (optional residual add) + LayerNorm epilogue.
# LayerNorm reduces over the full output dim, so N is kept un-tiled (= H).
# ----------------------------------------------------------------------------
def _make_matmul_ln_kernel(eps, has_residual):
    def kernel(*refs):
        if has_residual:
            x_ref, w_ref, b_ref, g_ref, bt_ref, r_ref, o_ref, acc_ref = refs
        else:
            x_ref, w_ref, b_ref, g_ref, bt_ref, o_ref, acc_ref = refs
            r_ref = None

        @pl.when(pl.program_id(1) == 0)
        def _():
            acc_ref[...] = jnp.zeros_like(acc_ref)

        acc_ref[...] += jnp.dot(x_ref[...].astype(jnp.bfloat16),
                                w_ref[...].astype(jnp.bfloat16),
                                preferred_element_type=jnp.float32)

        @pl.when(pl.program_id(1) == pl.num_programs(1) - 1)
        def _():
            y = acc_ref[...] + b_ref[...].astype(jnp.float32)
            if has_residual:
                y = y + r_ref[...].astype(jnp.float32)
            mu = jnp.mean(y, axis=-1, keepdims=True)
            yc = y - mu
            var = jnp.mean(yc * yc, axis=-1, keepdims=True)
            yn = yc * jax.lax.rsqrt(var + eps)
            o_ref[...] = (yn * g_ref[...].astype(jnp.float32)
                          + bt_ref[...].astype(jnp.float32)).astype(o_ref.dtype)
    return kernel


def pallas_linear_ln(x, w, b, gamma, beta, residual=None, eps=1e-5,
                     tm=256, tk=768):
    M, K = x.shape
    N = w.shape[1]
    tm, tk = _pick_tile(M, tm), _pick_tile(K, tk)

    in_specs = [pl.BlockSpec((tm, tk), lambda i, k: (i, k)),
                pl.BlockSpec((tk, N), lambda i, k: (k, 0)),
                pl.BlockSpec((1, N), lambda i, k: (0, 0)),
                pl.BlockSpec((1, N), lambda i, k: (0, 0)),
                pl.BlockSpec((1, N), lambda i, k: (0, 0))]
    args = [x, w.astype(jnp.bfloat16),
            b.reshape(1, N), gamma.reshape(1, N), beta.reshape(1, N)]
    if residual is not None:
        in_specs.append(pl.BlockSpec((tm, N), lambda i, k: (i, 0)))
        args.append(residual)

    return pl.pallas_call(
        _make_matmul_ln_kernel(eps, residual is not None),
        grid=(M // tm, K // tk),
        in_specs=in_specs,
        out_specs=pl.BlockSpec((tm, N), lambda i, k: (i, 0)),
        out_shape=jax.ShapeDtypeStruct((M, N), jnp.float32),
        scratch_shapes=[pltpu.VMEM((tm, N), jnp.float32)],
        compiler_params=pltpu.CompilerParams(
            dimension_semantics=("parallel", "arbitrary"),
            vmem_limit_bytes=_VMEM_LIMIT),
    )(*args)


# ----------------------------------------------------------------------------
# Flash-style attention: grid (B*heads, q-tile, kv-tile), online softmax,
# mask bias built from a tiny (B, 1, S) slab inside the kernel.
# ----------------------------------------------------------------------------
def _make_flash_kernel(scale):
    def kernel(q_ref, k_ref, v_ref, bias_ref, o_ref, m_sc, l_sc, acc_sc):
        ki = pl.program_id(2)

        @pl.when(ki == 0)
        def _():
            m_sc[...] = jnp.full_like(m_sc, -1e30)
            l_sc[...] = jnp.zeros_like(l_sc)
            acc_sc[...] = jnp.zeros_like(acc_sc)

        q = q_ref[0]                                     # (tq, D) bf16
        k = k_ref[0]                                     # (tk, D) bf16
        v = v_ref[0]                                     # (tk, D) bf16
        s = jax.lax.dot_general(q, k, (((1,), (1,)), ((), ())),
                                preferred_element_type=jnp.float32)
        s = s * scale + bias_ref[0]                      # (tq,tk) + (1,tk)

        m_prev = m_sc[...]
        m_new = jnp.maximum(m_prev, jnp.max(s, axis=-1, keepdims=True))
        alpha = jnp.exp(m_prev - m_new)
        p = jnp.exp(s - m_new)
        l_sc[...] = alpha * l_sc[...] + jnp.sum(p, axis=-1, keepdims=True)
        acc_sc[...] = alpha * acc_sc[...] + jnp.dot(
            p.astype(jnp.bfloat16), v, preferred_element_type=jnp.float32)
        m_sc[...] = m_new

        @pl.when(ki == pl.num_programs(2) - 1)
        def _():
            inv_l = pl.reciprocal(l_sc[...], approx=True)
            o_ref[0] = (acc_sc[...] * inv_l).astype(o_ref.dtype)
    return kernel


def pallas_flash_attention(q, k, v, bias, n_heads, out_dtype=jnp.float32,
                           tq=256, tk=256):
    BH, S, D = q.shape
    tq, tk = _pick_tile(S, tq), _pick_tile(S, tk)
    return pl.pallas_call(
        _make_flash_kernel(1.0 / math.sqrt(D)),
        grid=(BH, S // tq, S // tk),
        in_specs=[
            pl.BlockSpec((1, tq, D), lambda bh, qi, ki: (bh, qi, 0)),
            pl.BlockSpec((1, tk, D), lambda bh, qi, ki: (bh, ki, 0)),
            pl.BlockSpec((1, tk, D), lambda bh, qi, ki: (bh, ki, 0)),
            pl.BlockSpec((1, 1, tk), lambda bh, qi, ki: (bh // n_heads, 0, ki)),
        ],
        out_specs=pl.BlockSpec((1, tq, D), lambda bh, qi, ki: (bh, qi, 0)),
        out_shape=jax.ShapeDtypeStruct((BH, S, D), out_dtype),
        scratch_shapes=[pltpu.VMEM((tq, 1), jnp.float32),
                        pltpu.VMEM((tq, 1), jnp.float32),
                        pltpu.VMEM((tq, D), jnp.float32)],
        compiler_params=pltpu.CompilerParams(
            dimension_semantics=("parallel", "parallel", "arbitrary"),
            vmem_limit_bytes=_VMEM_LIMIT),
    )(q, k, v, bias)


# ----------------------------------------------------------------------------
# Standalone LayerNorm (used only for the embedding output)
# ----------------------------------------------------------------------------
def _layernorm_kernel(x_ref, g_ref, b_ref, o_ref, *, eps):
    x = x_ref[...].astype(jnp.float32)
    mu = jnp.mean(x, axis=-1, keepdims=True)
    xc = x - mu
    var = jnp.mean(xc * xc, axis=-1, keepdims=True)
    y = xc * jax.lax.rsqrt(var + eps)
    o_ref[...] = (y * g_ref[...] + b_ref[...]).astype(o_ref.dtype)


def pallas_layernorm(x, g, b, eps, tm=256):
    M, H = x.shape
    tm = _pick_tile(M, tm)
    return pl.pallas_call(
        functools.partial(_layernorm_kernel, eps=eps),
        grid=(M // tm,),
        in_specs=[pl.BlockSpec((tm, H), lambda i: (i, 0)),
                  pl.BlockSpec((1, H), lambda i: (0, 0)),
                  pl.BlockSpec((1, H), lambda i: (0, 0))],
        out_specs=pl.BlockSpec((tm, H), lambda i: (i, 0)),
        out_shape=jax.ShapeDtypeStruct((M, H), jnp.float32),
        compiler_params=pltpu.CompilerParams(
            dimension_semantics=("parallel",),
            vmem_limit_bytes=_VMEM_LIMIT),
    )(x, g.reshape(1, H), b.reshape(1, H))


# ----------------------------------------------------------------------------
# Parameter init (deterministic, synthetic; shapes follow the RoBERTa config)
# ----------------------------------------------------------------------------
def init_params(key, cfg):
    H, I, V, P = cfg["hidden"], cfg["inter"], cfg["vocab"], cfg["max_pos"]

    def nrm(k, shape):
        return (0.02 * jax.random.normal(k, shape)).astype(jnp.float32)

    keys = iter(jax.random.split(key, 8 + 8 * cfg["layers"]))
    params = {
        "word_emb": nrm(next(keys), (V, H)),
        "pos_emb": nrm(next(keys), (P, H)),
        "type_emb": nrm(next(keys), (1, H)),
        "emb_ln_g": jnp.ones((H,), jnp.float32),
        "emb_ln_b": jnp.zeros((H,), jnp.float32),
        "pool_w": nrm(next(keys), (H, H)),
        "pool_b": jnp.zeros((H,), jnp.float32),
        "cls_w": nrm(next(keys), (H, 1)),
        "cls_b": jnp.zeros((1,), jnp.float32),
        "layers": [],
    }
    for _ in range(cfg["layers"]):
        lp = {
            # fused Q|K|V projection: [H, 3H]
            "qkv_w": nrm(next(keys), (H, 3 * H)),
            "qkv_b": jnp.zeros((3 * H,), jnp.float32),
            "ao_w": nrm(next(keys), (H, H)), "ao_b": jnp.zeros((H,), jnp.float32),
            "ao_ln_g": jnp.ones((H,), jnp.float32),
            "ao_ln_b": jnp.zeros((H,), jnp.float32),
            "in_w": nrm(next(keys), (H, I)), "in_b": jnp.zeros((I,), jnp.float32),
            "o_w": nrm(next(keys), (I, H)), "o_b": jnp.zeros((H,), jnp.float32),
            "o_ln_g": jnp.ones((H,), jnp.float32),
            "o_ln_b": jnp.zeros((H,), jnp.float32),
        }
        params["layers"].append(lp)
    return params


# ----------------------------------------------------------------------------
# Forward pass (gather / head-reshape glue in plain JAX, hot path in Pallas)
# ----------------------------------------------------------------------------
def distil_rb_nores_forward(params, input_ids, attention_mask, cfg):
    B, S = input_ids.shape
    H, nH = cfg["hidden"], cfg["heads"]
    dH = H // nH
    eps = cfg["eps"]
    pad_id = 1

    # --- RoBERTa embeddings (gather is glue; LayerNorm is Pallas) ---
    ne = (input_ids != pad_id).astype(jnp.int32)
    position_ids = jnp.cumsum(ne, axis=1) * ne + pad_id
    emb = (jnp.take(params["word_emb"], input_ids, axis=0)
           + jnp.take(params["pos_emb"], position_ids, axis=0)
           + jnp.take(params["type_emb"], jnp.zeros_like(input_ids), axis=0))
    x = emb.reshape(B * S, H).astype(jnp.float32)
    x = pallas_layernorm(x, params["emb_ln_g"], params["emb_ln_b"], eps)
    # dropout -> identity (eval)

    # Tiny (B, 1, S) additive mask bias; never broadcast to (B*nH, S, S).
    bias = ((1.0 - attention_mask.astype(jnp.float32)) * (-1e9)).reshape(B, 1, S)

    n_layers = cfg["layers"]
    for li, lp in enumerate(params["layers"]):
        no_residual = li >= n_layers - 2   # layers [-2, -1] -> residual removed

        # fused Q/K/V projection (bf16 out), then one reshape/transpose to
        # head-major.
        # TODO(synk): head split/merge could be folded into BlockSpec index
        # maps once head_dim blocks are lane-aligned; kept as XLA glue here.
        qkv = pallas_linear(x, lp["qkv_w"], lp["qkv_b"],
                            out_dtype=jnp.bfloat16)                # [B*S, 3H]
        qkv = qkv.reshape(B, S, 3, nH, dH).transpose(2, 0, 3, 1, 4)
        qkv = qkv.reshape(3, B * nH, S, dH)

        ctx = pallas_flash_attention(qkv[0], qkv[1], qkv[2], bias, nH,
                                     out_dtype=jnp.bfloat16)
        ctx = ctx.reshape(B, nH, S, dH).transpose(0, 2, 1, 3).reshape(B * S, H)

        # attention output: dense + dropout(id) + LayerNorm[+residual], fused
        attn_out = pallas_linear_ln(
            ctx, lp["ao_w"], lp["ao_b"], lp["ao_ln_g"], lp["ao_ln_b"],
            residual=None if no_residual else x, eps=eps)

        # feed-forward: dense+GELU (bf16 out), then dense + LayerNorm[+residual]
        inter = pallas_linear(attn_out, lp["in_w"], lp["in_b"], act="gelu",
                              out_dtype=jnp.bfloat16)
        x = pallas_linear_ln(
            inter, lp["o_w"], lp["o_b"], lp["o_ln_g"], lp["o_ln_b"],
            residual=None if no_residual else attn_out, eps=eps)

    # pooler: tanh(dense(first token)); classification head: Linear(H, 1).
    # Negligible FLOPs with last-dim-1 output -> plain JAX (per perf review).
    seq_out = x.reshape(B, S, H)
    pooled = jnp.tanh(seq_out[:, 0, :] @ params["pool_w"] + params["pool_b"])
    logits = pooled @ params["cls_w"] + params["cls_b"]
    return logits  # [B, 1]


# ----------------------------------------------------------------------------
if __name__ == "__main__":
    cfg = dict(hidden=32, heads=4, inter=64, layers=4,
               vocab=100, max_pos=16, eps=1e-5)
    B, S = 2, 8

    key = jax.random.PRNGKey(0)
    k_param, k_ids = jax.random.split(key)
    params = init_params(k_param, cfg)

    input_ids = jax.random.randint(k_ids, (B, S), 2, cfg["vocab"], dtype=jnp.int32)
    attention_mask = jnp.ones((B, S), jnp.int32).at[1, -2:].set(0)

    logits = distil_rb_nores_forward(params, input_ids, attention_mask, cfg)
    jax.block_until_ready(logits)
    assert logits.shape == (B, 1) and logits.dtype == jnp.float32
    assert bool(jnp.all(jnp.isfinite(logits)))
    print("KERNEL_OK")
</pallas_src>

<mosaic_0001>
module attributes {stable_mosaic.version = 11 : i64} {
  func.func @_layernorm_kernel(%arg0: i32, %arg1: memref<16x32xf32, #tpu.memory_space<vmem>>, %arg2: memref<1x32xf32, #tpu.memory_space<vmem>>, %arg3: memref<1x32xf32, #tpu.memory_space<vmem>>, %arg4: memref<16x32xf32, #tpu.memory_space<vmem>>) attributes {dimension_semantics = [#tpu.dimension_semantics<parallel>], iteration_bounds = array<i64: 1>, scalar_prefetch = 0 : i64, scratch_operands = 0 : i64, tpu.core_type = #tpu.core_type<tc>, window_params = [{transform_indices = @transform_0, window_bounds = array<i64: 16, 32>}, {pipeline_mode = #tpu.pipeline_mode<synchronous>, transform_indices = @transform_1, window_bounds = array<i64: 1, 32>}, {pipeline_mode = #tpu.pipeline_mode<synchronous>, transform_indices = @transform_2, window_bounds = array<i64: 1, 32>}, {transform_indices = @transform_3, window_bounds = array<i64: 16, 32>}]} {
    %c0 = arith.constant 0 : index
    %c0_0 = arith.constant 0 : index
    %0 = vector.load %arg1[%c0, %c0_0] : memref<16x32xf32, #tpu.memory_space<vmem>>, vector<16x32xf32>
    %cst = arith.constant dense<0.000000e+00> : vector<16xf32>
    %1 = vector.multi_reduction <add>, %0, %cst [1] : vector<16x32xf32> to vector<16xf32>
    %2 = vector.shape_cast %1 : vector<16xf32> to vector<16x1xf32>
    %cst_1 = arith.constant 3.200000e+01 : f32
    %3 = vector.broadcast %cst_1 : f32 to vector<16x1xf32>
    %4 = arith.divf %2, %3 : vector<16x1xf32>
    %5 = vector.broadcast %4 : vector<16x1xf32> to vector<16x32xf32>
    %6 = arith.subf %0, %5 : vector<16x32xf32>
    %7 = arith.mulf %6, %6 : vector<16x32xf32>
    %cst_2 = arith.constant dense<0.000000e+00> : vector<16xf32>
    %8 = vector.multi_reduction <add>, %7, %cst_2 [1] : vector<16x32xf32> to vector<16xf32>
    %9 = vector.shape_cast %8 : vector<16xf32> to vector<16x1xf32>
    %cst_3 = arith.constant 3.200000e+01 : f32
    %10 = vector.broadcast %cst_3 : f32 to vector<16x1xf32>
    %11 = arith.divf %9, %10 : vector<16x1xf32>
    %cst_4 = arith.constant 9.99999974E-6 : f32
    %12 = vector.broadcast %cst_4 : f32 to vector<16x1xf32>
    %13 = arith.addf %11, %12 : vector<16x1xf32>
    %14 = math.rsqrt %13 : vector<16x1xf32>
    %15 = vector.broadcast %14 : vector<16x1xf32> to vector<16x32xf32>
    %16 = arith.mulf %6, %15 : vector<16x32xf32>
    %c0_5 = arith.constant 0 : index
    %c0_6 = arith.constant 0 : index
    %17 = vector.load %arg2[%c0_5, %c0_6] : memref<1x32xf32, #tpu.memory_space<vmem>>, vector<1x32xf32>
    %18 = vector.broadcast %17 : vector<1x32xf32> to vector<16x32xf32>
    %19 = arith.mulf %16, %18 : vector<16x32xf32>
    %c0_7 = arith.constant 0 : index
    %c0_8 = arith.constant 0 : index
    %20 = vector.load %arg3[%c0_7, %c0_8] : memref<1x32xf32, #tpu.memory_space<vmem>>, vector<1x32xf32>
    %21 = vector.broadcast %20 : vector<1x32xf32> to vector<16x32xf32>
    %22 = arith.addf %19, %21 : vector<16x32xf32>
    %c0_9 = arith.constant 0 : index
    %c0_10 = arith.constant 0 : index
    %23 = vector.load %arg4[%c0_9, %c0_10] : memref<16x32xf32, #tpu.memory_space<vmem>>, vector<16x32xf32>
    tpu.vector_store %arg4[%c0_9, %c0_10], %22 {strides = array<i32>} : memref<16x32xf32, #tpu.memory_space<vmem>>, vector<16x32xf32>,
    return
  }
  func.func @transform_0(%arg0: i32) -> (i32, i32) {
    %c0_i32 = arith.constant 0 : i32
    %c0_i32_0 = arith.constant 0 : i32
    return %arg0, %c0_i32 : i32, i32
  }
  func.func @transform_1(%arg0: i32) -> (i32, i32) {
    %c0_i32 = arith.constant 0 : i32
    %c0_i32_0 = arith.constant 0 : i32
    %c0_i32_1 = arith.constant 0 : i32
    return %c0_i32, %c0_i32_0 : i32, i32
  }
  func.func @transform_2(%arg0: i32) -> (i32, i32) {
    %c0_i32 = arith.constant 0 : i32
    %c0_i32_0 = arith.constant 0 : i32
    %c0_i32_1 = arith.constant 0 : i32
    return %c0_i32, %c0_i32_0 : i32, i32
  }
  func.func @transform_3(%arg0: i32) -> (i32, i32) {
    %c0_i32 = arith.constant 0 : i32
    %c0_i32_0 = arith.constant 0 : i32
    return %arg0, %c0_i32 : i32, i32
  }
}

</mosaic_0001>

<llo_original>
// kernel: tpu_custom_call.1
$region0: #{tpu_custom_call.1}
  #allocation0 [shape = 'u32[]', space=smem, size = 0x4, offset = 0x4, fixed_abs, tag = 'smem constant byte address 0x4 - core index']
  #allocation1 [shape = 'u32[72,128]{1,0:T(1,128)}', space=vmem, size = 0x9000, scoped, tag = 'internal scratch']
  %s0 = inlined_call_operand.hbm [shape: f32[16,32], index: 0, kind: input, shape index: {}]
  %s1 = inlined_call_operand.hbm [shape: f32[1,32], index: 1, kind: input, shape index: {}]
  %s2 = inlined_call_operand.vmem [shape: f32[1,32], index: 2, kind: input, shape index: {}]
  %s3 = inlined_call_operand.hbm [shape: f32[16,32], index: 3, kind: output, shape index: {}]
  %s4 = sld [smem:[#allocation0]]
  $region30: #{tpu_custom_call.1} parent=0
    _
  %s6 = ssub.s32 1, %s4
  %s7 = scalar_select 0, %s6, %s4
  $region1: #{tpu_custom_call.1} parent=0
    #allocation2 [shape = 'u8[8192]{0}', space=vmem, size = 0x2000, scoped, tag = 'input window, operand 0, single buffered']
    #allocation3 [shape = 's32[1]{0}', space=sflag, size = 0x4, scoped, tag = 'scoped memory for tpu_custom_call.1']
    #allocation4 [shape = 's32[1]{0}', space=sflag, size = 0x4, scoped, tag = 'scoped memory for tpu_custom_call.1']
    #allocation5 [shape = 'u8[512]{0}', space=vmem, size = 0x400, scoped, tag = 'input window, operand 1, single buffered']
    #allocation6 [shape = 's32[1]{0}', space=sflag, size = 0x4, scoped, tag = 'scoped memory for tpu_custom_call.1']
    #allocation7 [shape = 'u8[8192]{0}', space=vmem, size = 0x2000, scoped, tag = 'output window, operand 0, single buffered']
    %8 = vsyncpa [#allocation3], 0
    %9 = vsyncpa [#allocation6], 0
    %10 = vsyncpa [#allocation4], 0
    // Predicated region
    $region2: #{tpu_custom_call.1} parent=1 // pred_check
      _
    $region3: #{tpu_custom_call.1} parent=1 // pred_check_branch
      %12 = sbr.rel (0) target = $region5
    $region4: #{tpu_custom_call.1} parent=1 // pred_region
      %14 = vsyncadd [#allocation3], 0
      %s15 = sshll.u32 %s0, 4
      %s16 = int_to_ptr.hbm [resolvable:$true] %s15
      %s17 = sshll.u32 [#allocation2], 4
      %s18 = int_to_ptr.vmem [resolvable:$true] %s17
      %23 = dma.hbm_to_vmem [thread:$0]  %s16, 256, %s18, [#allocation3], 128, 128, 8
    $region5: #{tpu_custom_call.1} parent=1 // pred_fallthru
      _
    // Predicated region
    $region6: #{tpu_custom_call.1} parent=1 // pred_check
      _
    $region7: #{tpu_custom_call.1} parent=1 // pred_check_branch
      %25 = sbr.rel (0) target = $region9
    $region8: #{tpu_custom_call.1} parent=1 // pred_region
      %27 = vsyncadd [#allocation6], 0
      %s29 = sshll.u32 %s1, 4
      %s30 = int_to_ptr.hbm [resolvable:$true] %s29
      %s31 = sshll.u32 [#allocation5], 4
      %s32 = int_to_ptr.vmem [resolvable:$true] %s31
      %34 = dma.hbm_to_vmem [thread:$0]  %s30, 16, %s32, [#allocation6]
    $region9: #{tpu_custom_call.1} parent=1 // pred_fallthru
      _
    // Predicated region
    $region10: #{tpu_custom_call.1} parent=1 // pred_check
      _
    $region11: #{tpu_custom_call.1} parent=1 // pred_check_branch
      %36 = sbr.rel (0) target = $region13
    $region12: #{tpu_custom_call.1} parent=1 // pred_region
      _
    $region13: #{tpu_custom_call.1} parent=1 // pred_fallthru
      _
    // Predicated region
    $region14: #{tpu_custom_call.1} parent=1 // pred_check
      _
    $region15: #{tpu_custom_call.1} parent=1 // pred_check_branch
      %38 = sbr.rel (0) target = $region17
    $region16: #{tpu_custom_call.1} parent=1 // pred_region
      %40 = dma.done [#allocation3], 256
    $region17: #{tpu_custom_call.1} parent=1 // pred_fallthru
      _
    // Predicated region
    $region18: #{tpu_custom_call.1} parent=1 // pred_check
      _
    $region19: #{tpu_custom_call.1} parent=1 // pred_check_branch
      %42 = sbr.rel (0) target = $region21
    $region20: #{tpu_custom_call.1} parent=1 // pred_region
      %44 = dma.done [#allocation6], 16
    $region21: #{tpu_custom_call.1} parent=1 // pred_fallthru
      _
    %v45 = vld [vmem:[#allocation2] sm:$0xff]
    %v46 = vld [vmem:[#allocation2 + $0x8] sm:$0xff]
    %vm47 = vcmask 261120
    %v48 = vsel %vm47, %v45, 0.0
    %49 = vadd.xlane.f32.xlu0 %v48
    %v50 = vpop.xlane.xlu0 %49
    %v51 = vsel %vm47, %v46, 0.0
    %52 = vadd.xlane.f32.xlu0 %v51
    %v53 = vpop.xlane.xlu0 %52
    %v54 = vrcp.pop 32.0
    %v55 = vmul.f32 32.0, %v54
    %v56 = vsub.f32 1.0, %v55
    %v57 = vmul.f32 %v54, %v56
    %v58 = vadd.f32 %v54, %v57
    %vm59 = vweird.f32 %v54
    %v60 = vsel %vm59, %v54, %v58
    %v61 = vmul.f32 %v50, %v60
    %v62 = vmul.f32 %v53, %v60
    %v63 = vsub.f32 %v45, %v61
    %v64 = vsub.f32 %v46, %v62
    %v65 = vmul.f32 %v63, %v63
    %v66 = vmul.f32 %v64, %v64
    %v67 = vsel %vm47, %v65, 0.0
    %68 = vadd.xlane.f32.xlu0 %v67
    %v69 = vpop.xlane.xlu0 %68
    %v70 = vsel %vm47, %v66, 0.0
    %71 = vadd.xlane.f32.xlu0 %v70
    %v72 = vpop.xlane.xlu0 %71
    %v73 = vmul.f32 %v69, %v60
    %v74 = vmul.f32 %v72, %v60
    %v75 = vadd.f32 %v73, 1e-05
    %v76 = vadd.f32 %v74, 1e-05
    %v77 = vrsqrt.pop %v75
    %v78 = vmul.f32 %v77, %v75
    %v79 = vmul.f32 %v78, %v77
    %v80 = vmul.f32 0.5, %v79
    %v81 = vsub.f32 1.5, %v80
    %v82 = vmul.f32 %v77, %v81
    %vm83 = vweird.f32 %v75
    %vm84 = vweird.f32 %v77
    %vm85 = vmor %vm83, %vm84
    %v86 = vsel %vm85, %v77, %v82
    %v87 = vrsqrt.pop %v76
    %v88 = vmul.f32 %v87, %v76
    %v89 = vmul.f32 %v88, %v87
    %v90 = vmul.f32 0.5, %v89
    %v91 = vsub.f32 1.5, %v90
    %v92 = vmul.f32 %v87, %v91
    %vm93 = vweird.f32 %v76
    %vm94 = vweird.f32 %v87
    %vm95 = vmor %vm93, %vm94
    %v96 = vsel %vm95, %v87, %v92
    %v97 = vmul.f32 %v63, %v86
    %v98 = vmul.f32 %v64, %v96
    %v99 = vld [vmem:[#allocation5] sm:$0x1]
    %v101 = vperm.slane %v99, 0
    %v103 = vmul.f32 %v97, %v101
    %v104 = vmul.f32 %v98, %v101
    %v105 = vld [vmem:[%s2] sm:$0x1]
    %v107 = vperm.slane %v105, 0
    %v109 = vadd.f32 %v103, %v107
    %v110 = vadd.f32 %v104, %v107
    %111 = vst.msk [vmem:[#allocation7] sm:$0xff] %vm47, %v109
    %112 = vst.msk [vmem:[#allocation7 + $0x8] sm:$0xff] %vm47, %v110
    // Predicated region
    $region22: #{tpu_custom_call.1} parent=1 // pred_check
      _
    $region23: #{tpu_custom_call.1} parent=1 // pred_check_branch
      %114 = sbr.rel (0) target = $region25
    $region24: #{tpu_custom_call.1} parent=1 // pred_region
      %116 = vsyncadd [#allocation4], 0
      %s117 = sshll.u32 [#allocation7], 4
      %s118 = int_to_ptr.vmem [resolvable:$true] %s117
      %s119 = sshll.u32 %s3, 4
      %s120 = int_to_ptr.hbm [resolvable:$true] %s119
      %125 = dma.vmem_to_hbm [thread:$0]  %s118, 256, %s120, [#allocation4], 128, 128, 8
    $region25: #{tpu_custom_call.1} parent=1 // pred_fallthru
      _
    // Predicated region
    $region26: #{tpu_custom_call.1} parent=1 // pred_check
      _
    $region27: #{tpu_custom_call.1} parent=1 // pred_check_branch
      %127 = sbr.rel (0) target = $region29
    $region28: #{tpu_custom_call.1} parent=1 // pred_region
      %129 = dma.done [#allocation4], 256
    $region29: #{tpu_custom_call.1} parent=1 // pred_fallthru
      _
    %130 = vsyncpa [#allocation3], 1
    %131 = vsyncpa [#allocation6], 1
    %132 = vsyncpa [#allocation4], 1

</llo_original>
